<compile_context>
chip_gen: v6e
topology: v6e:2x2x1
jax: 0.10.0
libtpu: 0.0.40
codegen_flags: <defaults>
</compile_context>

<pallas_src>
import jax
import jax.numpy as jnp
from jax.experimental import pallas as pl
from jax.experimental.pallas import tpu as pltpu


# ----------------------------------------------------------------------------
# helpers
# ----------------------------------------------------------------------------
def _round_up(x, m):
    return ((x + m - 1) // m) * m


def _pad2(a, rows, cols):
    return jnp.pad(a, ((0, rows - a.shape[0]), (0, cols - a.shape[1])))


def _choose_tile(n):
    """Node-dim padding and tile size (128-aligned, up to 512)."""
    n_pad = _round_up(max(n, 1), 128)
    tile = min(512, n_pad)
    n_pad = _round_up(n_pad, tile)
    return n_pad, tile


def _block_nnz(adj_pad, tile):
    """int32[nb*nb] flag per (row_block, col_block): 1 iff block has nonzeros."""
    nb = adj_pad.shape[0] // tile
    blk = jnp.abs(adj_pad).reshape(nb, tile, nb, tile).sum(axis=(1, 3))
    return (blk > 0).astype(jnp.int32).reshape(-1)


# ----------------------------------------------------------------------------
# Pallas kernels
# ----------------------------------------------------------------------------
def _gcn_layer1_kernel(nnz_ref, adj_ref, x_ref, w_ref, b_ref, drop_ref,
                       o_ref, acc_ref):
    """acc = sum_k A[i,k] @ X[k];  out[i] = dropout(relu(acc @ W1 + b1))."""
    i = pl.program_id(0)
    k = pl.program_id(1)
    nk = pl.num_programs(1)

    @pl.when(k == 0)
    def _():
        acc_ref[...] = jnp.zeros_like(acc_ref)

    # Skip MXU work for all-zero adjacency blocks (graph sparsity).
    @pl.when(nnz_ref[i * nk + k] > 0)
    def _():
        acc_ref[...] += jnp.dot(adj_ref[...], x_ref[...],
                                preferred_element_type=jnp.float32)

    @pl.when(k == nk - 1)
    def _():
        h = jnp.dot(acc_ref[...].astype(w_ref.dtype), w_ref[...],
                    preferred_element_type=jnp.float32)
        y = jnp.maximum(h + b_ref[...], 0.0)
        o_ref[...] = (y * drop_ref[...]).astype(o_ref.dtype)


def _gcn_layer2_kernel(nnz_ref, adj_ref, x_ref, w2_ref, b2_ref, wo_ref, bo_ref,
                       o_ref, acc_ref):
    """acc = sum_k A[i,k] @ X[k];  out[i] = softmax((acc @ W2 + b2) @ Wo + bo)."""
    i = pl.program_id(0)
    k = pl.program_id(1)
    nk = pl.num_programs(1)

    @pl.when(k == 0)
    def _():
        acc_ref[...] = jnp.zeros_like(acc_ref)

    @pl.when(nnz_ref[i * nk + k] > 0)
    def _():
        acc_ref[...] += jnp.dot(adj_ref[...], x_ref[...],
                                preferred_element_type=jnp.float32)

    @pl.when(k == nk - 1)
    def _():
        h = jnp.dot(acc_ref[...].astype(w2_ref.dtype), w2_ref[...],
                    preferred_element_type=jnp.float32) + b2_ref[...]
        # padded lanes of bo are -1e30 -> exp underflows to 0 -> softmax over
        # the real classes only.
        logits = jnp.dot(h.astype(wo_ref.dtype), wo_ref[...],
                         preferred_element_type=jnp.float32) + bo_ref[...]
        m = jnp.max(logits, axis=1, keepdims=True)
        e = jnp.exp(logits - m)
        o_ref[...] = (e / jnp.sum(e, axis=1, keepdims=True)).astype(o_ref.dtype)


# ----------------------------------------------------------------------------
# pallas_call wrappers
# ----------------------------------------------------------------------------
def gcn_branch0(nnz, adj, x, w1, b1, drop, *, tile):
    n_pad = adj.shape[0]
    cin_p = x.shape[1]
    hid_p = w1.shape[1]
    nb = n_pad // tile
    return pl.pallas_call(
        _gcn_layer1_kernel,
        out_shape=jax.ShapeDtypeStruct((n_pad, hid_p), jnp.float32),
        grid_spec=pltpu.PrefetchScalarGridSpec(
            num_scalar_prefetch=1,
            grid=(nb, nb),
            in_specs=[
                pl.BlockSpec((tile, tile), lambda i, k, nnz: (i, k)),     # A_hat
                pl.BlockSpec((tile, cin_p), lambda i, k, nnz: (k, 0)),    # X
                pl.BlockSpec((cin_p, hid_p), lambda i, k, nnz: (0, 0)),   # W1
                pl.BlockSpec((1, hid_p), lambda i, k, nnz: (0, 0)),       # b1
                pl.BlockSpec((tile, hid_p), lambda i, k, nnz: (i, 0)),    # drop
            ],
            out_specs=pl.BlockSpec((tile, hid_p), lambda i, k, nnz: (i, 0)),
            scratch_shapes=[pltpu.VMEM((tile, cin_p), jnp.float32)],
        ),
        compiler_params=pltpu.CompilerParams(
            dimension_semantics=("parallel", "arbitrary")),
    )(nnz, adj, x, w1, b1, drop)


def gcn_branch1(nnz, adj, x, w2, b2, wo, bo, *, tile):
    n_pad = adj.shape[0]
    hid_p = x.shape[1]
    cout_p = wo.shape[1]
    nb = n_pad // tile
    return pl.pallas_call(
        _gcn_layer2_kernel,
        out_shape=jax.ShapeDtypeStruct((n_pad, cout_p), jnp.float32),
        grid_spec=pltpu.PrefetchScalarGridSpec(
            num_scalar_prefetch=1,
            grid=(nb, nb),
            in_specs=[
                pl.BlockSpec((tile, tile), lambda i, k, nnz: (i, k)),      # A_hat
                pl.BlockSpec((tile, hid_p), lambda i, k, nnz: (k, 0)),     # X
                pl.BlockSpec((hid_p, hid_p), lambda i, k, nnz: (0, 0)),    # W2
                pl.BlockSpec((1, hid_p), lambda i, k, nnz: (0, 0)),        # b2
                pl.BlockSpec((hid_p, cout_p), lambda i, k, nnz: (0, 0)),   # Wout
                pl.BlockSpec((1, cout_p), lambda i, k, nnz: (0, 0)),       # bout
            ],
            out_specs=pl.BlockSpec((tile, cout_p), lambda i, k, nnz: (i, 0)),
            scratch_shapes=[pltpu.VMEM((tile, hid_p), jnp.float32)],
        ),
        compiler_params=pltpu.CompilerParams(
            dimension_semantics=("parallel", "arbitrary")),
    )(nnz, adj, x, w2, b2, wo, bo)


# ----------------------------------------------------------------------------
# Plain-JAX glue: GCN normalization (add self loops, symmetric norm).
# NOTE: densifying A_hat is O(N^2) host-side; fine for the demo sizes here.
# ----------------------------------------------------------------------------
def normalized_adjacency(edge_index, num_nodes):
    src, dst = edge_index[0], edge_index[1]
    a = jnp.zeros((num_nodes, num_nodes), jnp.float32)
    a = a.at[dst, src].add(1.0)                      # A[dst, src] = 1
    a = a + jnp.eye(num_nodes, dtype=jnp.float32)    # self loops
    deg = a.sum(axis=1)
    d_inv_sqrt = jnp.where(deg > 0, 1.0 / jnp.sqrt(deg), 0.0)
    return d_inv_sqrt[:, None] * a * d_inv_sqrt[None, :]


class GCNPallas:
    """Deterministically-initialized parameters matching the torch module shapes."""

    def __init__(self, in_channels, out_channels, hidden_channels, key):
        k1, k2, k3, k4 = jax.random.split(key, 4)
        w1 = jax.random.normal(k1, (in_channels, hidden_channels),
                               jnp.float32) * (1.0 / jnp.sqrt(in_channels))
        b1 = jnp.zeros((1, hidden_channels), jnp.float32)
        w2 = jax.random.normal(k2, (hidden_channels, hidden_channels),
                               jnp.float32) * (1.0 / jnp.sqrt(hidden_channels))
        b2 = jnp.zeros((1, hidden_channels), jnp.float32)
        wo = jax.random.normal(k3, (hidden_channels, out_channels),
                               jnp.float32) * (1.0 / jnp.sqrt(hidden_channels))
        bo = jax.random.normal(k4, (1, out_channels), jnp.float32) * 0.01

        self.in_channels = in_channels
        self.out_channels = out_channels
        self.hidden_channels = hidden_channels
        self.cin_p = _round_up(in_channels, 128)
        self.hid_p = _round_up(hidden_channels, 128)
        self.cout_p = _round_up(out_channels, 128)

        # Lane-padded (128) parameters; matmul operands in bf16, biases f32.
        self.w1 = _pad2(w1, self.cin_p, self.hid_p).astype(jnp.bfloat16)
        self.b1 = _pad2(b1, 1, self.hid_p)
        self.w2 = _pad2(w2, self.hid_p, self.hid_p).astype(jnp.bfloat16)
        self.b2 = _pad2(b2, 1, self.hid_p)
        self.wo = _pad2(wo, self.hid_p, self.cout_p).astype(jnp.bfloat16)
        # padded class lanes get -1e30 so they vanish under softmax
        self.bo = jnp.full((1, self.cout_p), -1e30, jnp.float32)
        self.bo = self.bo.at[0, :out_channels].set(bo[0])
        self.training = True

    def __call__(self, x, edge_index, i, *, dropout_key=None):
        n = x.shape[0]
        adj = normalized_adjacency(edge_index, n)
        n_pad, tile = _choose_tile(n)
        adj_p = _pad2(adj, n_pad, n_pad)
        nnz = _block_nnz(adj_p, tile)
        adj_b = adj_p.astype(jnp.bfloat16)

        if i == 0:
            x_p = _pad2(x, n_pad, self.cin_p).astype(jnp.bfloat16)
            if self.training:
                key = dropout_key if dropout_key is not None else jax.random.PRNGKey(0)
                keep = jax.random.bernoulli(key, 0.5, (n_pad, self.hid_p))
                drop = keep.astype(jnp.float32) * 2.0        # 1/(1-p) = 2
            else:
                drop = jnp.ones((n_pad, self.hid_p), jnp.float32)
            out = gcn_branch0(nnz, adj_b, x_p, self.w1, self.b1, drop, tile=tile)
            return out[:n, :self.hidden_channels]
        else:
            x_p = _pad2(x, n_pad, self.hid_p).astype(jnp.bfloat16)
            out = gcn_branch1(nnz, adj_b, x_p, self.w2, self.b2,
                              self.wo, self.bo, tile=tile)
            return out[:n, :self.out_channels]


# ----------------------------------------------------------------------------
if __name__ == "__main__":
    key = jax.random.PRNGKey(0)
    k_x, k_p, k_d = jax.random.split(key, 3)

    N, C_IN, HID, C_OUT = 8, 4, 32, 3

    x = jax.random.normal(k_x, (N, C_IN), jnp.float32)
    # small deterministic ring + chords graph, edge_index: [2, E]
    src = jnp.array([0, 1, 2, 3, 4, 5, 6, 7, 0, 2, 4, 6], dtype=jnp.int32)
    dst = jnp.array([1, 2, 3, 4, 5, 6, 7, 0, 4, 6, 0, 2], dtype=jnp.int32)
    edge_index = jnp.stack([src, dst], axis=0)

    model = GCNPallas(C_IN, C_OUT, HID, k_p)

    # branch i == 0 : conv1 -> relu -> dropout(0.5)
    out0 = model(x, edge_index, 0, dropout_key=k_d)
    jax.block_until_ready(out0)
    assert out0.shape == (N, HID)

    # branch i != 0 : conv2 -> linear -> softmax(dim=1)
    out1 = model(out0, edge_index, 1)
    jax.block_until_ready(out1)
    assert out1.shape == (N, C_OUT)
    # softmax rows sum to 1
    assert jnp.allclose(jnp.sum(out1, axis=1), 1.0, atol=1e-5)

    print("KERNEL_OK")
</pallas_src>

<mosaic_0001>
module attributes {stable_mosaic.version = 11 : i64} {
  func.func @_gcn_layer1_kernel(%arg0: i32, %arg1: i32, %arg2: memref<1xi32, #tpu.memory_space<smem>>, %arg3: memref<128x128xbf16, #tpu.memory_space<vmem>>, %arg4: memref<128x128xbf16, #tpu.memory_space<vmem>>, %arg5: memref<128x128xbf16, #tpu.memory_space<vmem>>, %arg6: memref<1x128xf32, #tpu.memory_space<vmem>>, %arg7: memref<128x128xf32, #tpu.memory_space<vmem>>, %arg8: memref<128x128xf32, #tpu.memory_space<vmem>>, %arg9: memref<128x128xf32, #tpu.memory_space<vmem>>) attributes {dimension_semantics = [#tpu.dimension_semantics<parallel>, #tpu.dimension_semantics<arbitrary>], iteration_bounds = array<i64: 1, 1>, scalar_prefetch = 1 : i64, scratch_operands = 1 : i64, tpu.core_type = #tpu.core_type<tc>, window_params = [{transform_indices = @transform_0, window_bounds = array<i64: 128, 128>}, {transform_indices = @transform_1, window_bounds = array<i64: 128, 128>}, {pipeline_mode = #tpu.pipeline_mode<synchronous>, transform_indices = @transform_2, window_bounds = array<i64: 128, 128>}, {pipeline_mode = #tpu.pipeline_mode<synchronous>, transform_indices = @transform_3, window_bounds = array<i64: 1, 128>}, {transform_indices = @transform_4, window_bounds = array<i64: 128, 128>}, {transform_indices = @transform_5, window_bounds = array<i64: 128, 128>}]} {
    %c0_i32 = arith.constant 0 : i32
    %0 = arith.cmpi eq, %arg1, %c0_i32 : i32
    %1 = arith.extui %0 : i1 to i32
    %c0_i32_0 = arith.constant 0 : i32
    %2 = arith.cmpi ne, %1, %c0_i32_0 : i32
    scf.if %2 {
      %cst = arith.constant 0.000000e+00 : f32
      %13 = vector.broadcast %cst : f32 to vector<128x128xf32>
      %c0 = arith.constant 0 : index
      %c0_5 = arith.constant 0 : index
      %14 = vector.load %arg9[%c0, %c0_5] : memref<128x128xf32, #tpu.memory_space<vmem>>, vector<128x128xf32>
      tpu.vector_store %arg9[%c0, %c0_5], %13 {strides = array<i32>} : memref<128x128xf32, #tpu.memory_space<vmem>>, vector<128x128xf32>,
    } else {
    }
    %c1_i32 = arith.constant 1 : i32
    %3 = arith.muli %arg0, %c1_i32 : i32
    %4 = arith.addi %3, %arg1 : i32
    %5 = arith.index_cast %4 : i32 to index
    %6 = memref.load %arg2[%5] : memref<1xi32, #tpu.memory_space<smem>>
    %c0_i32_1 = arith.constant 0 : i32
    %7 = arith.cmpi sgt, %6, %c0_i32_1 : i32
    %8 = arith.extui %7 : i1 to i32
    %c0_i32_2 = arith.constant 0 : i32
    %9 = arith.cmpi ne, %8, %c0_i32_2 : i32
    scf.if %9 {
      %c0 = arith.constant 0 : index
      %c0_5 = arith.constant 0 : index
      %13 = vector.load %arg9[%c0, %c0_5] : memref<128x128xf32, #tpu.memory_space<vmem>>, vector<128x128xf32>
      %c0_6 = arith.constant 0 : index
      %c0_7 = arith.constant 0 : index
      %14 = vector.load %arg3[%c0_6, %c0_7] : memref<128x128xbf16, #tpu.memory_space<vmem>>, vector<128x128xbf16>
      %c0_8 = arith.constant 0 : index
      %c0_9 = arith.constant 0 : index
      %15 = vector.load %arg4[%c0_8, %c0_9] : memref<128x128xbf16, #tpu.memory_space<vmem>>, vector<128x128xbf16>
      %cst = arith.constant dense<0.000000e+00> : vector<128x128xf32>
      %16 = tpu.matmul %14, %15, %cst {dimension_numbers = #tpu.dot_dimension_numbers<[1], [0], [0], [1], [0, 0, 1, 1], [], []>} : vector<128x128xbf16>, vector<128x128xbf16>, vector<128x128xf32> -> vector<128x128xf32>
      %17 = arith.addf %13, %16 : vector<128x128xf32>
      %c0_10 = arith.constant 0 : index
      %c0_11 = arith.constant 0 : index
      %18 = vector.load %arg9[%c0_10, %c0_11] : memref<128x128xf32, #tpu.memory_space<vmem>>, vector<128x128xf32>
      tpu.vector_store %arg9[%c0_10, %c0_11], %17 {strides = array<i32>} : memref<128x128xf32, #tpu.memory_space<vmem>>, vector<128x128xf32>,
    } else {
    }
    %c0_i32_3 = arith.constant 0 : i32
    %10 = arith.cmpi eq, %arg1, %c0_i32_3 : i32
    %11 = arith.extui %10 : i1 to i32
    %c0_i32_4 = arith.constant 0 : i32
    %12 = arith.cmpi ne, %11, %c0_i32_4 : i32
    scf.if %12 {
      %c0 = arith.constant 0 : index
      %c0_5 = arith.constant 0 : index
      %13 = vector.load %arg9[%c0, %c0_5] : memref<128x128xf32, #tpu.memory_space<vmem>>, vector<128x128xf32>
      %14 = arith.truncf %13 : vector<128x128xf32> to vector<128x128xbf16>
      %c0_6 = arith.constant 0 : index
      %c0_7 = arith.constant 0 : index
      %15 = vector.load %arg5[%c0_6, %c0_7] : memref<128x128xbf16, #tpu.memory_space<vmem>>, vector<128x128xbf16>
      %cst = arith.constant dense<0.000000e+00> : vector<128x128xf32>
      %16 = tpu.matmul %14, %15, %cst {dimension_numbers = #tpu.dot_dimension_numbers<[1], [0], [0], [1], [0, 0, 1, 1], [], []>} : vector<128x128xbf16>, vector<128x128xbf16>, vector<128x128xf32> -> vector<128x128xf32>
      %c0_8 = arith.constant 0 : index
      %c0_9 = arith.constant 0 : index
      %17 = vector.load %arg6[%c0_8, %c0_9] : memref<1x128xf32, #tpu.memory_space<vmem>>, vector<1x128xf32>
      %18 = vector.broadcast %17 : vector<1x128xf32> to vector<128x128xf32>
      %19 = arith.addf %16, %18 : vector<128x128xf32>
      %cst_10 = arith.constant 0.000000e+00 : f32
      %20 = vector.broadcast %cst_10 : f32 to vector<128x128xf32>
      %21 = arith.maximumf %19, %20 : vector<128x128xf32>
      %c0_11 = arith.constant 0 : index
      %c0_12 = arith.constant 0 : index
      %22 = vector.load %arg7[%c0_11, %c0_12] : memref<128x128xf32, #tpu.memory_space<vmem>>, vector<128x128xf32>
      %23 = arith.mulf %21, %22 : vector<128x128xf32>
      %c0_13 = arith.constant 0 : index
      %c0_14 = arith.constant 0 : index
      %24 = vector.load %arg8[%c0_13, %c0_14] : memref<128x128xf32, #tpu.memory_space<vmem>>, vector<128x128xf32>
      tpu.vector_store %arg8[%c0_13, %c0_14], %23 {strides = array<i32>} : memref<128x128xf32, #tpu.memory_space<vmem>>, vector<128x128xf32>,
    } else {
    }
    return
  }
  func.func @transform_0(%arg0: i32, %arg1: i32, %arg2: memref<1xi32, #tpu.memory_space<smem>>) -> (i32, i32) {
    %c0_i32 = arith.constant 0 : i32
    return %arg0, %arg1 : i32, i32
  }
  func.func @transform_1(%arg0: i32, %arg1: i32, %arg2: memref<1xi32, #tpu.memory_space<smem>>) -> (i32, i32) {
    %c0_i32 = arith.constant 0 : i32
    %c0_i32_0 = arith.constant 0 : i32
    return %arg1, %c0_i32 : i32, i32
  }
  func.func @transform_2(%arg0: i32, %arg1: i32, %arg2: memref<1xi32, #tpu.memory_space<smem>>) -> (i32, i32) {
    %c0_i32 = arith.constant 0 : i32
    %c0_i32_0 = arith.constant 0 : i32
    %c0_i32_1 = arith.constant 0 : i32
    return %c0_i32, %c0_i32_0 : i32, i32
  }
  func.func @transform_3(%arg0: i32, %arg1: i32, %arg2: memref<1xi32, #tpu.memory_space<smem>>) -> (i32, i32) {
    %c0_i32 = arith.constant 0 : i32
    %c0_i32_0 = arith.constant 0 : i32
    %c0_i32_1 = arith.constant 0 : i32
    return %c0_i32, %c0_i32_0 : i32, i32
  }
  func.func @transform_4(%arg0: i32, %arg1: i32, %arg2: memref<1xi32, #tpu.memory_space<smem>>) -> (i32, i32) {
    %c0_i32 = arith.constant 0 : i32
    %c0_i32_0 = arith.constant 0 : i32
    return %arg0, %c0_i32 : i32, i32
  }
  func.func @transform_5(%arg0: i32, %arg1: i32, %arg2: memref<1xi32, #tpu.memory_space<smem>>) -> (i32, i32) {
    %c0_i32 = arith.constant 0 : i32
    %c0_i32_0 = arith.constant 0 : i32
    return %arg0, %c0_i32 : i32, i32
  }
}

</mosaic_0001>

<llo_original>
// kernel: tpu_custom_call.1
$region0: #{tpu_custom_call.1}
  #allocation0 [shape = 'u32[]', space=smem, size = 0x4, offset = 0x4, fixed_abs, tag = 'smem constant byte address 0x4 - core index']
  #allocation1 [shape = 'u32[144,128]{1,0:T(1,128)}', space=vmem, size = 0x12000, scoped, tag = 'internal scratch']
  #allocation2 [shape = 'f32[128,128]{1,0:T(8,128)}', space=vmem, size = 0x10000, scoped, tag = 'scratch operand']
  #allocation3 [shape = 's32[1]{0}', space=sflag, size = 0x4, scoped, tag = 'scoped memory for tpu_custom_call.1']
  #allocation4 [shape = 's32[1]{0:T(128)S(6)}', space=smem, size = 0x200, scoped, tag = 'prefetched SMEM operand 0']
  %s0 = inlined_call_operand.<no memory space> [shape: s32[1], index: 0, kind: input, shape index: {}]
  %s1 = inlined_call_operand.hbm [shape: bf16[128,128], index: 1, kind: input, shape index: {}]
  %s2 = inlined_call_operand.hbm [shape: bf16[128,128], index: 2, kind: input, shape index: {}]
  %s3 = inlined_call_operand.hbm [shape: bf16[128,128], index: 3, kind: input, shape index: {}]
  %s4 = inlined_call_operand.vmem [shape: f32[1,128], index: 4, kind: input, shape index: {}]
  %s5 = inlined_call_operand.hbm [shape: f32[128,128], index: 5, kind: input, shape index: {}]
  %s6 = inlined_call_operand.hbm [shape: f32[128,128], index: 6, kind: output, shape index: {}]
  %s7 = sld [smem:[#allocation0]]
  $region58: #{tpu_custom_call.1} parent=0
    _
  %s9 = ssub.s32 1, %s7
  %s10 = scalar_select 0, %s9, %s7
  %11 = sst [smem:[#allocation4]] %s0
  $region1: #{tpu_custom_call.1} parent=0
    #allocation5 [shape = 'u8[32768]{0}', space=vmem, size = 0x8000, scoped, tag = 'input window, operand 1, single buffered']
    #allocation6 [shape = 's32[1]{0}', space=sflag, size = 0x4, scoped, tag = 'scoped memory for tpu_custom_call.1']
    #allocation7 [shape = 's32[1]{0}', space=sflag, size = 0x4, scoped, tag = 'scoped memory for tpu_custom_call.1']
    #allocation8 [shape = 'u8[32768]{0}', space=vmem, size = 0x8000, scoped, tag = 'input window, operand 2, single buffered']
    #allocation9 [shape = 's32[1]{0}', space=sflag, size = 0x4, scoped, tag = 'scoped memory for tpu_custom_call.1']
    #allocation10 [shape = 'u8[32768]{0}', space=vmem, size = 0x8000, scoped, tag = 'input window, operand 3, single buffered']
    #allocation11 [shape = 'u8[65536]{0}', space=vmem, size = 0x10000, scoped, tag = 'input window, operand 5, single buffered']
    #allocation12 [shape = 's32[1]{0}', space=sflag, size = 0x4, scoped, tag = 'scoped memory for tpu_custom_call.1']
    #allocation13 [shape = 'u8[65536]{0}', space=vmem, size = 0x10000, scoped, tag = 'output window, operand 0, single buffered']
    %12 = vsyncpa [#allocation6], 0
    %13 = vsyncpa [#allocation9], 0
    %14 = vsyncpa [#allocation12], 0
    %15 = vsyncpa [#allocation7], 0
    // Predicated region
    $region2: #{tpu_custom_call.1} parent=1 // pred_check
      _
    $region3: #{tpu_custom_call.1} parent=1 // pred_check_branch
      %17 = sbr.rel (0) target = $region5
    $region4: #{tpu_custom_call.1} parent=1 // pred_region
      %s19 = ssub.s32 1024, 1024
      %20 = vsyncadd [#allocation6], %s19
      %s21 = sshll.u32 [#allocation5], 4
      %s22 = int_to_ptr.vmem [resolvable:$true] %s21
      %27 = dma.hbm_to_vmem [thread:$0]  %s1, 1024, %s22, [#allocation6], 64, 64, 4
    $region5: #{tpu_custom_call.1} parent=1 // pred_fallthru
      _
    // Predicated region
    $region6: #{tpu_custom_call.1} parent=1 // pred_check
      _
    $region7: #{tpu_custom_call.1} parent=1 // pred_check_branch
      %29 = sbr.rel (0) target = $region9
    $region8: #{tpu_custom_call.1} parent=1 // pred_region
      %s31 = ssub.s32 1024, 1024
      %32 = vsyncadd [#allocation9], %s31
      %s33 = sshll.u32 [#allocation8], 4
      %s34 = int_to_ptr.vmem [resolvable:$true] %s33
      %39 = dma.hbm_to_vmem [thread:$0]  %s2, 1024, %s34, [#allocation9], 64, 64, 4
    $region9: #{tpu_custom_call.1} parent=1 // pred_fallthru
      _
    // Predicated region
    $region10: #{tpu_custom_call.1} parent=1 // pred_check
      _
    $region11: #{tpu_custom_call.1} parent=1 // pred_check_branch
      %41 = sbr.rel (0) target = $region13
    $region12: #{tpu_custom_call.1} parent=1 // pred_region
      %s43 = ssub.s32 1024, 1024
      %44 = vsyncadd [#allocation9], %s43
      %s45 = sshll.u32 [#allocation10], 4
      %s46 = int_to_ptr.vmem [resolvable:$true] %s45
      %51 = dma.hbm_to_vmem [thread:$0]  %s3, 1024, %s46, [#allocation9], 64, 64, 4
    $region13: #{tpu_custom_call.1} parent=1 // pred_fallthru
      _
    // Predicated region
    $region14: #{tpu_custom_call.1} parent=1 // pred_check
      _
    $region15: #{tpu_custom_call.1} parent=1 // pred_check_branch
      %53 = sbr.rel (0) target = $region17
    $region16: #{tpu_custom_call.1} parent=1 // pred_region
      _
    $region17: #{tpu_custom_call.1} parent=1 // pred_fallthru
      _
    // Predicated region
    $region18: #{tpu_custom_call.1} parent=1 // pred_check
      _
    $region19: #{tpu_custom_call.1} parent=1 // pred_check_branch
      %55 = sbr.rel (0) target = $region21
    $region20: #{tpu_custom_call.1} parent=1 // pred_region
      %s57 = ssub.s32 2048, 2048
      %58 = vsyncadd [#allocation12], %s57
      %s59 = sshll.u32 [#allocation11], 4
      %s60 = int_to_ptr.vmem [resolvable:$true] %s59
      %65 = dma.hbm_to_vmem [thread:$0]  %s5, 2048, %s60, [#allocation12], 128, 128, 8
    $region21: #{tpu_custom_call.1} parent=1 // pred_fallthru
      _
    // Predicated region
    $region22: #{tpu_custom_call.1} parent=1 // pred_check
      _
    $region23: #{tpu_custom_call.1} parent=1 // pred_check_branch
      %67 = sbr.rel (0) target = $region25
    $region24: #{tpu_custom_call.1} parent=1 // pred_region
      %68 = dma.done [#allocation6], 1024
    $region25: #{tpu_custom_call.1} parent=1 // pred_fallthru
      _
    // Predicated region
    $region26: #{tpu_custom_call.1} parent=1 // pred_check
      _
    $region27: #{tpu_custom_call.1} parent=1 // pred_check_branch
      %70 = sbr.rel (0) target = $region29
    $region28: #{tpu_custom_call.1} parent=1 // pred_region
      %71 = dma.done [#allocation9], 1024
    $region29: #{tpu_custom_call.1} parent=1 // pred_fallthru
      _
    // Predicated region
    $region30: #{tpu_custom_call.1} parent=1 // pred_check
      _
    $region31: #{tpu_custom_call.1} parent=1 // pred_check_branch
      %73 = sbr.rel (0) target = $region33
    $region32: #{tpu_custom_call.1} parent=1 // pred_region
      %74 = dma.done [#allocation9], 1024
    $region33: #{tpu_custom_call.1} parent=1 // pred_fallthru
      _
    // Predicated region
    $region34: #{tpu_custom_call.1} parent=1 // pred_check
      _
    $region35: #{tpu_custom_call.1} parent=1 // pred_check_branch
      %76 = sbr.rel (0) target = $region37
    $region36: #{tpu_custom_call.1} parent=1 // pred_region
      %77 = dma.done [#allocation12], 2048
    $region37: #{tpu_custom_call.1} parent=1 // pred_fallthru
      _
    %p79 = scmp.eq.s32.totalorder 0, 0
    // Predicated region
    $region38: #{tpu_custom_call.1} parent=1 // pred_check
      %p80 = pneg %p79
    $region39: #{tpu_custom_call.1} parent=1 // pred_check_branch
      %82 = sbr.rel (%p80) target = $region41
    $region40: #{tpu_custom_call.1} parent=1 // pred_region
      %83 = vst [vmem:[#allocation2] sm:$0xff] 0.0
      %84 = vst [vmem:[#allocation2 + $0x8] sm:$0xff] 0.0
      %85 = vst [vmem:[#allocation2 + $0x10] sm:$0xff] 0.0
      %86 = vst [vmem:[#allocation2 + $0x18] sm:$0xff] 0.0
      %87 = vst [vmem:[#allocation2 + $0x20] sm:$0xff] 0.0
      %88 = vst [vmem:[#allocation2 + $0x28] sm:$0xff] 0.0
      %89 = vst [vmem:[#allocation2 + $0x30] sm:$0xff] 0.0
      %90 = vst [vmem:[#allocation2 + $0x38] sm:$0xff] 0.0
      %91 = vst [vmem:[#allocation2 + $0x40] sm:$0xff] 0.0
      %92 = vst [vmem:[#allocation2 + $0x48] sm:$0xff] 0.0
      %93 = vst [vmem:[#allocation2 + $0x50] sm:$0xff] 0.0
      %94 = vst [vmem:[#allocation2 + $0x58] sm:$0xff] 0.0
      %95 = vst [vmem:[#allocation2 + $0x60] sm:$0xff] 0.0
      %96 = vst [vmem:[#allocation2 + $0x68] sm:$0xff] 0.0
      %97 = vst [vmem:[#allocation2 + $0x70] sm:$0xff] 0.0
      %98 = vst [vmem:[#allocation2 + $0x78] sm:$0xff] 0.0
    $region41: #{tpu_custom_call.1} parent=1 // pred_fallthru
      _
    %s99 = sadd.s32 0, 0
    %s100 = sld [smem:[#allocation4 + %s99]]
    %p101 = scmp.gt.s32.totalorder %s100, 0
    // Predicated region
    $region42: #{tpu_custom_call.1} parent=1 // pred_check
      %p102 = pneg %p101
    $region43: #{tpu_custom_call.1} parent=1 // pred_check_branch
      %104 = sbr.rel (%p102) target = $region45
    $region44: #{tpu_custom_call.1} parent=1 // pred_region
      %v105 = vld [vmem:[#allocation2] sm:$0xff]
      %v106 = vld [vmem:[#allocation2 + $0x8] sm:$0xff]
      %v107 = vld [vmem:[#allocation2 + $0x10] sm:$0xff]
      %v108 = vld [vmem:[#allocation2 + $0x18] sm:$0xff]
      %v109 = vld [vmem:[#allocation2 + $0x20] sm:$0xff]
      %v110 = vld [vmem:[#allocation2 + $0x28] sm:$0xff]
      %v111 = vld [vmem:[#allocation2 + $0x30] sm:$0xff]
      %v112 = vld [vmem:[#allocation2 + $0x38] sm:$0xff]
      %v113 = vld [vmem:[#allocation2 + $0x40] sm:$0xff]
      %v114 = vld [vmem:[#allocation2 + $0x48] sm:$0xff]
      %v115 = vld [vmem:[#allocation2 + $0x50] sm:$0xff]
      %v116 = vld [vmem:[#allocation2 + $0x58] sm:$0xff]
      %v117 = vld [vmem:[#allocation2 + $0x60] sm:$0xff]
      %v118 = vld [vmem:[#allocation2 + $0x68] sm:$0xff]
      %v119 = vld [vmem:[#allocation2 + $0x70] sm:$0xff]
      %v120 = vld [vmem:[#allocation2 + $0x78] sm:$0xff]
      %v121 = vld [vmem:[#allocation5] sm:$0xf]
      %v122 = vld [vmem:[#allocation5 + $0x4] sm:$0xf]
      %v123 = vld [vmem:[#allocation5 + $0x8] sm:$0xf]
      %v124 = vld [vmem:[#allocation5 + $0xc] sm:$0xf]
      %v125 = vld [vmem:[#allocation5 + $0x10] sm:$0xf]
      %v126 = vld [vmem:[#allocation5 + $0x14] sm:$0xf]
      %v127 = vld [vmem:[#allocation5 + $0x18] sm:$0xf]
      %v128 = vld [vmem:[#allocation5 + $0x1c] sm:$0xf]
      %v129 = vld [vmem:[#allocation5 + $0x20] sm:$0xf]
      %v130 = vld [vmem:[#allocation5 + $0x24] sm:$0xf]
      %v131 = vld [vmem:[#allocation5 + $0x28] sm:$0xf]
      %v132 = vld [vmem:[#allocation5 + $0x2c] sm:$0xf]
      %v133 = vld [vmem:[#allocation5 + $0x30] sm:$0xf]
      %v134 = vld [vmem:[#allocation5 + $0x34] sm:$0xf]
      %v135 = vld [vmem:[#allocation5 + $0x38] sm:$0xf]
      %v136 = vld [vmem:[#allocation5 + $0x3c] sm:$0xf]
      %v137 = vld [vmem:[#allocation8] sm:$0xf]
      %v138 = vld [vmem:[#allocation8 + $0x4] sm:$0xf]
      %v139 = vld [vmem:[#allocation8 + $0x8] sm:$0xf]
      %v140 = vld [vmem:[#allocation8 + $0xc] sm:$0xf]
      %v141 = vld [vmem:[#allocation8 + $0x10] sm:$0xf]
      %v142 = vld [vmem:[#allocation8 + $0x14] sm:$0xf]
      %v143 = vld [vmem:[#allocation8 + $0x18] sm:$0xf]
      %v144 = vld [vmem:[#allocation8 + $0x1c] sm:$0xf]
      %v145 = vld [vmem:[#allocation8 + $0x20] sm:$0xf]
      %v146 = vld [vmem:[#allocation8 + $0x24] sm:$0xf]
      %v147 = vld [vmem:[#allocation8 + $0x28] sm:$0xf]
      %v148 = vld [vmem:[#allocation8 + $0x2c] sm:$0xf]
      %v149 = vld [vmem:[#allocation8 + $0x30] sm:$0xf]
      %v150 = vld [vmem:[#allocation8 + $0x34] sm:$0xf]
      %v151 = vld [vmem:[#allocation8 + $0x38] sm:$0xf]
      %v152 = vld [vmem:[#allocation8 + $0x3c] sm:$0xf]
      %v169 = vunpack.c.l.b16 %v121
      %v170 = vunpack.c.l.b16 %v122
      %v171 = vunpack.c.l.b16 %v123
      %v172 = vunpack.c.l.b16 %v124
      %v173 = vunpack.c.l.b16 %v125
      %v174 = vunpack.c.l.b16 %v126
      %v175 = vunpack.c.l.b16 %v127
      %v176 = vunpack.c.l.b16 %v128
      %v177 = vunpack.c.l.b16 %v129
      %v178 = vunpack.c.l.b16 %v130
      %v179 = vunpack.c.l.b16 %v131
      %v180 = vunpack.c.l.b16 %v132
      %v181 = vunpack.c.l.b16 %v133
      %v182 = vunpack.c.l.b16 %v134
      %v183 = vunpack.c.l.b16 %v135
      %v184 = vunpack.c.l.b16 %v136
      %v185 = vpack.c.b16 %v170, %v169
      %v186 = vpack.c.b16 %v172, %v171
      %v187 = vpack.c.b16 %v174, %v173
      %v188 = vpack.c.b16 %v176, %v175
      %v189 = vpack.c.b16 %v178, %v177
      %v190 = vpack.c.b16 %v180, %v179
      %v191 = vpack.c.b16 %v182, %v181
      %v192 = vpack.c.b16 %v184, %v183
      %v217 = vunpack.c.l.b16 %v137
      %v218 = vunpack.c.l.b16 %v138
      %v219 = vunpack.c.l.b16 %v139
      %v220 = vunpack.c.l.b16 %v140
      %v221 = vunpack.c.l.b16 %v141
      %v222 = vunpack.c.l.b16 %v142
      %v223 = vunpack.c.l.b16 %v143
      %v224 = vunpack.c.l.b16 %v144
      %v225 = vunpack.c.l.b16 %v145
      %v226 = vunpack.c.l.b16 %v146
      %v227 = vunpack.c.l.b16 %v147
      %v228 = vunpack.c.l.b16 %v148
      %v229 = vunpack.c.l.b16 %v149
      %v230 = vunpack.c.l.b16 %v150
      %v231 = vunpack.c.l.b16 %v151
      %v232 = vunpack.c.l.b16 %v152
      %v233 = vpack.c.b16 %v218, %v217
      %v234 = vpack.c.b16 %v220, %v219
      %v235 = vpack.c.b16 %v222, %v221
      %v236 = vpack.c.b16 %v224, %v223
      %v237 = vpack.c.b16 %v226, %v225
      %v238 = vpack.c.b16 %v228, %v227
      %v239 = vpack.c.b16 %v230, %v229
      %v240 = vpack.c.b16 %v232, %v231
      %249 = vmatprep.subr.bf16.mxu0 0
      %250 = vmatpush1.bf16.msra.mxu0 %v240
      %251 = vmatprep.subr.bf16.mxu0 0
      %252 = vmatpush1.bf16.msra.mxu0 %v239
      %253 = vmatprep.subr.bf16.mxu0 0
      %254 = vmatpush1.bf16.msra.mxu0 %v238
      %255 = vmatprep.subr.bf16.mxu0 0
      %256 = vmatpush1.bf16.msra.mxu0 %v237
      %257 = vmatprep.subr.bf16.mxu0 0
      %258 = vmatpush1.bf16.msra.mxu0 %v236
      %259 = vmatprep.subr.bf16.mxu0 0
      %260 = vmatpush1.bf16.msra.mxu0 %v235
      %261 = vmatprep.subr.bf16.mxu0 0
      %262 = vmatpush1.bf16.msra.mxu0 %v234
      %263 = vmatprep.subr.bf16.mxu0 0
      %264 = vmatpush1.bf16.msra.mxu0 %v233
      %265 = vmatprep.subr.bf16.mxu0 0
      %266 = vmatpush2.bf16.msra.mxu0 0
      %267 = vmatprep.subr.bf16.mxu0 0
      %268 = vmatpush2.bf16.msra.mxu0 0
      %269 = vmatprep.subr.bf16.mxu0 0
      %270 = vmatpush2.bf16.msra.mxu0 0
      %271 = vmatprep.subr.bf16.mxu0 0
      %272 = vmatpush2.bf16.msra.mxu0 0
      %273 = vmatprep.subr.bf16.mxu0 0
      %274 = vmatpush2.bf16.msra.mxu0 0
      %275 = vmatprep.subr.bf16.mxu0 0
      %276 = vmatpush2.bf16.msra.mxu0 0
      %277 = vmatprep.subr.bf16.mxu0 0
      %278 = vmatpush2.bf16.msra.mxu0 0
      %279 = vmatprep.subr.bf16.mxu0 0
      %280 = vmatpush2.bf16.msra.mxu0 0
      %281 = vmatprep.mubr.bf16.mxu0 0
      %282 = vmatmul.mubr.bf16.gmra.mxu0 %v185
      %v283 = vpop.f32.mrf.mxu0
      %v284 = vadd.f32 0.0, %v283
      %v285 = vpop.f32.mrf.mxu0
      %v286 = vpop.f32.mrf.mxu0
      %v287 = vadd.f32 0.0, %v286
      %v288 = vpop.f32.mrf.mxu0
      %289 = vmatprep.mubr.bf16.mxu0 0
      %290 = vmatmul.mubr.bf16.gmra.mxu0 %v186
      %v291 = vpop.f32.mrf.mxu0
      %v292 = vadd.f32 0.0, %v291
      %v293 = vpop.f32.mrf.mxu0
      %v294 = vpop.f32.mrf.mxu0
      %v295 = vadd.f32 0.0, %v294
      %v296 = vpop.f32.mrf.mxu0
      %297 = vmatprep.mubr.bf16.mxu0 0
      %298 = vmatmul.mubr.bf16.gmra.mxu0 %v187
      %v299 = vpop.f32.mrf.mxu0
      %v300 = vadd.f32 0.0, %v299
      %v301 = vpop.f32.mrf.mxu0
      %v302 = vpop.f32.mrf.mxu0
      %v303 = vadd.f32 0.0, %v302
      %v304 = vpop.f32.mrf.mxu0
      %305 = vmatprep.mubr.bf16.mxu0 0
      %306 = vmatmul.mubr.bf16.gmra.mxu0 %v188
      %v307 = vpop.f32.mrf.mxu0
      %v308 = vadd.f32 0.0, %v307
      %v309 = vpop.f32.mrf.mxu0
      %v310 = vpop.f32.mrf.mxu0
      %v311 = vadd.f32 0.0, %v310
      %v312 = vpop.f32.mrf.mxu0
      %313 = vmatprep.mubr.bf16.mxu0 0
      %314 = vmatmul.mubr.bf16.gmra.mxu0 %v189
      %v315 = vpop.f32.mrf.mxu0
      %v316 = vadd.f32 0.0, %v315
      %v317 = vpop.f32.mrf.mxu0
      %v318 = vpop.f32.mrf.mxu0
      %v319 = vadd.f32 0.0, %v318
      %v320 = vpop.f32.mrf.mxu0
      %321 = vmatprep.mubr.bf16.mxu0 0
      %322 = vmatmul.mubr.bf16.gmra.mxu0 %v190
      %v323 = vpop.f32.mrf.mxu0
      %v324 = vadd.f32 0.0, %v323
      %v325 = vpop.f32.mrf.mxu0
      %v326 = vpop.f32.mrf.mxu0
      %v327 = vadd.f32 0.0, %v326
      %v328 = vpop.f32.mrf.mxu0
      %329 = vmatprep.mubr.bf16.mxu0 0
      %330 = vmatmul.mubr.bf16.gmra.mxu0 %v191
      %v331 = vpop.f32.mrf.mxu0
      %v332 = vadd.f32 0.0, %v331
      %v333 = vpop.f32.mrf.mxu0
      %v334 = vpop.f32.mrf.mxu0
      %v335 = vadd.f32 0.0, %v334
      %v336 = vpop.f32.mrf.mxu0
      %337 = vmatprep.mubr.bf16.mxu0 0
      %338 = vmatmul.mubr.bf16.gmra.mxu0 %v192
      %v339 = vpop.f32.mrf.mxu0
      %v340 = vadd.f32 0.0, %v339
      %v341 = vpop.f32.mrf.mxu0
      %v342 = vpop.f32.mrf.mxu0
      %v343 = vadd.f32 0.0, %v342
      %v344 = vpop.f32.mrf.mxu0
      %345 = vdwg.mxu0
      %v346 = vadd.f32 %v105, %v284
      %v347 = vadd.f32 %v106, %v287
      %v348 = vadd.f32 %v107, %v292
      %v349 = vadd.f32 %v108, %v295
      %v350 = vadd.f32 %v109, %v300
      %v351 = vadd.f32 %v110, %v303
      %v352 = vadd.f32 %v111, %v308
      %v353 = vadd.f32 %v112, %v311
      %v354 = vadd.f32 %v113, %v316
      %v355 = vadd.f32 %v114, %v319
      %v356 = vadd.f32 %v115, %v324
      %v357 = vadd.f32 %v116, %v327
      %v358 = vadd.f32 %v117, %v332
      %v359 = vadd.f32 %v118, %v335
      %v360 = vadd.f32 %v119, %v340
      %v361 = vadd.f32 %v120, %v343
      %362 = vst [vmem:[#allocation2] sm:$0xff] %v346
      %363 = vst [vmem:[#allocation2 + $0x8] sm:$0xff] %v347
      %364 = vst [vmem:[#allocation2 + $0x10] sm:$0xff] %v348
      %365 = vst [vmem:[#allocation2 + $0x18] sm:$0xff] %v349
      %366 = vst [vmem:[#allocation2 + $0x20] sm:$0xff] %v350
      %367 = vst [vmem:[#allocation2 + $0x28] sm:$0xff] %v351
      %368 = vst [vmem:[#allocation2 + $0x30] sm:$0xff] %v352
      %369 = vst [vmem:[#allocation2 + $0x38] sm:$0xff] %v353
      %370 = vst [vmem:[#allocation2 + $0x40] sm:$0xff] %v354
      %371 = vst [vmem:[#allocation2 + $0x48] sm:$0xff] %v355
      %372 = vst [vmem:[#allocation2 + $0x50] sm:$0xff] %v356
      %373 = vst [vmem:[#allocation2 + $0x58] sm:$0xff] %v357
      %374 = vst [vmem:[#allocation2 + $0x60] sm:$0xff] %v358
      %375 = vst [vmem:[#allocation2 + $0x68] sm:$0xff] %v359
      %376 = vst [vmem:[#allocation2 + $0x70] sm:$0xff] %v360
      %377 = vst [vmem:[#allocation2 + $0x78] sm:$0xff] %v361
    $region45: #{tpu_custom_call.1} parent=1 // pred_fallthru
      _
    // Predicated region
    $region46: #{tpu_custom_call.1} parent=1 // pred_check
      %p378 = pneg %p79
    $region47: #{tpu_custom_call.1} parent=1 // pred_check_branch
      %380 = sbr.rel (%p378) target = $region49
    $region48: #{tpu_custom_call.1} parent=1 // pred_region
      %v381 = vld [vmem:[#allocation2] sm:$0xff]
      %v382 = vld [vmem:[#allocation2 + $0x8] sm:$0xff]
      %v383 = vld [vmem:[#allocation2 + $0x10] sm:$0xff]
      %v384 = vld [vmem:[#allocation2 + $0x18] sm:$0xff]
      %v385 = vld [vmem:[#allocation2 + $0x20] sm:$0xff]
      %v386 = vld [vmem:[#allocation2 + $0x28] sm:$0xff]
      %v387 = vld [vmem:[#allocation2 + $0x30] sm:$0xff]
      %v388 = vld [vmem:[#allocation2 + $0x38] sm:$0xff]
      %v389 = vld [vmem:[#allocation2 + $0x40] sm:$0xff]
      %v390 = vld [vmem:[#allocation2 + $0x48] sm:$0xff]
      %v391 = vld [vmem:[#allocation2 + $0x50] sm:$0xff]
      %v392 = vld [vmem:[#allocation2 + $0x58] sm:$0xff]
      %v393 = vld [vmem:[#allocation2 + $0x60] sm:$0xff]
      %v394 = vld [vmem:[#allocation2 + $0x68] sm:$0xff]
      %v395 = vld [vmem:[#allocation2 + $0x70] sm:$0xff]
      %v396 = vld [vmem:[#allocation2 + $0x78] sm:$0xff]
      %v397 = vpack.c.bf16 %v382, %v381
      %v398 = vpack.c.bf16 %v384, %v383
      %v399 = vpack.c.bf16 %v386, %v385
      %v400 = vpack.c.bf16 %v388, %v387
      %v401 = vpack.c.bf16 %v390, %v389
      %v402 = vpack.c.bf16 %v392, %v391
      %v403 = vpack.c.bf16 %v394, %v393
      %v404 = vpack.c.bf16 %v396, %v395
      %v405 = vld [vmem:[#allocation10] sm:$0xf]
      %v406 = vld [vmem:[#allocation10 + $0x4] sm:$0xf]
      %v407 = vld [vmem:[#allocation10 + $0x8] sm:$0xf]
      %v408 = vld [vmem:[#allocation10 + $0xc] sm:$0xf]
      %v409 = vld [vmem:[#allocation10 + $0x10] sm:$0xf]
      %v410 = vld [vmem:[#allocation10 + $0x14] sm:$0xf]
      %v411 = vld [vmem:[#allocation10 + $0x18] sm:$0xf]
      %v412 = vld [vmem:[#allocation10 + $0x1c] sm:$0xf]
      %v413 = vld [vmem:[#allocation10 + $0x20] sm:$0xf]
      %v414 = vld [vmem:[#allocation10 + $0x24] sm:$0xf]
      %v415 = vld [vmem:[#allocation10 + $0x28] sm:$0xf]
      %v416 = vld [vmem:[#allocation10 + $0x2c] sm:$0xf]
      %v417 = vld [vmem:[#allocation10 + $0x30] sm:$0xf]
      %v418 = vld [vmem:[#allocation10 + $0x34] sm:$0xf]
      %v419 = vld [vmem:[#allocation10 + $0x38] sm:$0xf]
      %v420 = vld [vmem:[#allocation10 + $0x3c] sm:$0xf]
      %v421 = vld [vmem:[%s4] sm:$0x1]
      %v423 = vlaneseq
      %v424 = vshrl.u32 %v423, 7
      %v425 = vsub.s32 0, %v424
      %v426 = vrot.slane %v421, %v425
      %v444 = vunpack.c.l.b16 %v405
      %v445 = vunpack.c.l.b16 %v406
      %v446 = vunpack.c.l.b16 %v407
      %v447 = vunpack.c.l.b16 %v408
      %v448 = vunpack.c.l.b16 %v409
      %v449 = vunpack.c.l.b16 %v410
      %v450 = vunpack.c.l.b16 %v411
      %v451 = vunpack.c.l.b16 %v412
      %v452 = vunpack.c.l.b16 %v413
      %v453 = vunpack.c.l.b16 %v414
      %v454 = vunpack.c.l.b16 %v415
      %v455 = vunpack.c.l.b16 %v416
      %v456 = vunpack.c.l.b16 %v417
      %v457 = vunpack.c.l.b16 %v418
      %v458 = vunpack.c.l.b16 %v419
      %v459 = vunpack.c.l.b16 %v420
      %v460 = vpack.c.b16 %v445, %v444
      %v461 = vpack.c.b16 %v447, %v446
      %v462 = vpack.c.b16 %v449, %v448
      %v463 = vpack.c.b16 %v451, %v450
      %v464 = vpack.c.b16 %v453, %v452
      %v465 = vpack.c.b16 %v455, %v454
      %v466 = vpack.c.b16 %v457, %v456
      %v467 = vpack.c.b16 %v459, %v458
      %476 = vmatprep.subr.bf16.mxu0 0
      %477 = vmatpush1.bf16.msra.mxu0 %v467
      %478 = vmatprep.subr.bf16.mxu0 0
      %479 = vmatpush1.bf16.msra.mxu0 %v466
      %480 = vmatprep.subr.bf16.mxu0 0
      %481 = vmatpush1.bf16.msra.mxu0 %v465
      %482 = vmatprep.subr.bf16.mxu0 0
      %483 = vmatpush1.bf16.msra.mxu0 %v464
      %484 = vmatprep.subr.bf16.mxu0 0
      %485 = vmatpush1.bf16.msra.mxu0 %v463
      %486 = vmatprep.subr.bf16.mxu0 0
      %487 = vmatpush1.bf16.msra.mxu0 %v462
      %488 = vmatprep.subr.bf16.mxu0 0
      %489 = vmatpush1.bf16.msra.mxu0 %v461
      %490 = vmatprep.subr.bf16.mxu0 0
      %491 = vmatpush1.bf16.msra.mxu0 %v460
      %492 = vmatprep.subr.bf16.mxu0 0
      %493 = vmatpush2.bf16.msra.mxu0 0
      %494 = vmatprep.subr.bf16.mxu0 0
      %495 = vmatpush2.bf16.msra.mxu0 0
      %496 = vmatprep.subr.bf16.mxu0 0
      %497 = vmatpush2.bf16.msra.mxu0 0
      %498 = vmatprep.subr.bf16.mxu0 0
      %499 = vmatpush2.bf16.msra.mxu0 0
      %500 = vmatprep.subr.bf16.mxu0 0
      %501 = vmatpush2.bf16.msra.mxu0 0
      %502 = vmatprep.subr.bf16.mxu0 0
      %503 = vmatpush2.bf16.msra.mxu0 0
      %504 = vmatprep.subr.bf16.mxu0 0
      %505 = vmatpush2.bf16.msra.mxu0 0
      %506 = vmatprep.subr.bf16.mxu0 0
      %507 = vmatpush2.bf16.msra.mxu0 0
      %508 = vmatprep.mubr.bf16.mxu0 0
      %509 = vmatmul.mubr.bf16.gmra.mxu0 %v397
      %v510 = vpop.f32.mrf.mxu0
      %v511 = vadd.f32 %v426, %v510
      %v512 = vpop.f32.mrf.mxu0
      %v513 = vpop.f32.mrf.mxu0
      %v514 = vadd.f32 %v426, %v513
      %v515 = vpop.f32.mrf.mxu0
      %516 = vmatprep.mubr.bf16.mxu0 0
      %517 = vmatmul.mubr.bf16.gmra.mxu0 %v398
      %v518 = vpop.f32.mrf.mxu0
      %v519 = vadd.f32 %v426, %v518
      %v520 = vpop.f32.mrf.mxu0
      %v521 = vpop.f32.mrf.mxu0
      %v522 = vadd.f32 %v426, %v521
      %v523 = vpop.f32.mrf.mxu0
      %524 = vmatprep.mubr.bf16.mxu0 0
      %525 = vmatmul.mubr.bf16.gmra.mxu0 %v399
      %v526 = vpop.f32.mrf.mxu0
      %v527 = vadd.f32 %v426, %v526
      %v528 = vpop.f32.mrf.mxu0
      %v529 = vpop.f32.mrf.mxu0
      %v530 = vadd.f32 %v426, %v529
      %v531 = vpop.f32.mrf.mxu0
      %532 = vmatprep.mubr.bf16.mxu0 0
      %533 = vmatmul.mubr.bf16.gmra.mxu0 %v400
      %v534 = vpop.f32.mrf.mxu0
      %v535 = vadd.f32 %v426, %v534
      %v536 = vpop.f32.mrf.mxu0
      %v537 = vpop.f32.mrf.mxu0
      %v538 = vadd.f32 %v426, %v537
      %v539 = vpop.f32.mrf.mxu0
      %540 = vmatprep.mubr.bf16.mxu0 0
      %541 = vmatmul.mubr.bf16.gmra.mxu0 %v401
      %v542 = vpop.f32.mrf.mxu0
      %v543 = vadd.f32 %v426, %v542
      %v544 = vpop.f32.mrf.mxu0
      %v545 = vpop.f32.mrf.mxu0
      %v546 = vadd.f32 %v426, %v545
      %v547 = vpop.f32.mrf.mxu0
      %548 = vmatprep.mubr.bf16.mxu0 0
      %549 = vmatmul.mubr.bf16.gmra.mxu0 %v402
      %v550 = vpop.f32.mrf.mxu0
      %v551 = vadd.f32 %v426, %v550
      %v552 = vpop.f32.mrf.mxu0
      %v553 = vpop.f32.mrf.mxu0
      %v554 = vadd.f32 %v426, %v553
      %v555 = vpop.f32.mrf.mxu0
      %556 = vmatprep.mubr.bf16.mxu0 0
      %557 = vmatmul.mubr.bf16.gmra.mxu0 %v403
      %v558 = vpop.f32.mrf.mxu0
      %v559 = vadd.f32 %v426, %v558
      %v560 = vpop.f32.mrf.mxu0
      %v561 = vpop.f32.mrf.mxu0
      %v562 = vadd.f32 %v426, %v561
      %v563 = vpop.f32.mrf.mxu0
      %564 = vmatprep.mubr.bf16.mxu0 0
      %565 = vmatmul.mubr.bf16.gmra.mxu0 %v404
      %v566 = vpop.f32.mrf.mxu0
      %v567 = vadd.f32 %v426, %v566
      %v568 = vpop.f32.mrf.mxu0
      %v569 = vpop.f32.mrf.mxu0
      %v570 = vadd.f32 %v426, %v569
      %v571 = vpop.f32.mrf.mxu0
      %572 = vdwg.mxu0
      %v573 = vmax.f32 %v511, 0.0
      %v574 = vmax.f32 %v514, 0.0
      %v575 = vmax.f32 %v519, 0.0
      %v576 = vmax.f32 %v522, 0.0
      %v577 = vmax.f32 %v527, 0.0
      %v578 = vmax.f32 %v530, 0.0
      %v579 = vmax.f32 %v535, 0.0
      %v580 = vmax.f32 %v538, 0.0
      %v581 = vmax.f32 %v543, 0.0
      %v582 = vmax.f32 %v546, 0.0
      %v583 = vmax.f32 %v551, 0.0
      %v584 = vmax.f32 %v554, 0.0
      %v585 = vmax.f32 %v559, 0.0
      %v586 = vmax.f32 %v562, 0.0
      %v587 = vmax.f32 %v567, 0.0
      %v588 = vmax.f32 %v570, 0.0
      %v589 = vld [vmem:[#allocation11] sm:$0xff]
      %v590 = vld [vmem:[#allocation11 + $0x8] sm:$0xff]
      %v591 = vld [vmem:[#allocation11 + $0x10] sm:$0xff]
      %v592 = vld [vmem:[#allocation11 + $0x18] sm:$0xff]
      %v593 = vld [vmem:[#allocation11 + $0x20] sm:$0xff]
      %v594 = vld [vmem:[#allocation11 + $0x28] sm:$0xff]
      %v595 = vld [vmem:[#allocation11 + $0x30] sm:$0xff]
      %v596 = vld [vmem:[#allocation11 + $0x38] sm:$0xff]
      %v597 = vld [vmem:[#allocation11 + $0x40] sm:$0xff]
      %v598 = vld [vmem:[#allocation11 + $0x48] sm:$0xff]
      %v599 = vld [vmem:[#allocation11 + $0x50] sm:$0xff]
      %v600 = vld [vmem:[#allocation11 + $0x58] sm:$0xff]
      %v601 = vld [vmem:[#allocation11 + $0x60] sm:$0xff]
      %v602 = vld [vmem:[#allocation11 + $0x68] sm:$0xff]
      %v603 = vld [vmem:[#allocation11 + $0x70] sm:$0xff]
      %v604 = vld [vmem:[#allocation11 + $0x78] sm:$0xff]
      %v605 = vmul.f32 %v573, %v589
      %v606 = vmul.f32 %v574, %v590
      %v607 = vmul.f32 %v575, %v591
      %v608 = vmul.f32 %v576, %v592
      %v609 = vmul.f32 %v577, %v593
      %v610 = vmul.f32 %v578, %v594
      %v611 = vmul.f32 %v579, %v595
      %v612 = vmul.f32 %v580, %v596
      %v613 = vmul.f32 %v581, %v597
      %v614 = vmul.f32 %v582, %v598
      %v615 = vmul.f32 %v583, %v599
      %v616 = vmul.f32 %v584, %v600
      %v617 = vmul.f32 %v585, %v601
      %v618 = vmul.f32 %v586, %v602
      %v619 = vmul.f32 %v587, %v603
      %v620 = vmul.f32 %v588, %v604
      %621 = vst [vmem:[#allocation13] sm:$0xff] %v605
      %622 = vst [vmem:[#allocation13 + $0x8] sm:$0xff] %v606
      %623 = vst [vmem:[#allocation13 + $0x10] sm:$0xff] %v607
      %624 = vst [vmem:[#allocation13 + $0x18] sm:$0xff] %v608
      %625 = vst [vmem:[#allocation13 + $0x20] sm:$0xff] %v609
      %626 = vst [vmem:[#allocation13 + $0x28] sm:$0xff] %v610
      %627 = vst [vmem:[#allocation13 + $0x30] sm:$0xff] %v611
      %628 = vst [vmem:[#allocation13 + $0x38] sm:$0xff] %v612
      %629 = vst [vmem:[#allocation13 + $0x40] sm:$0xff] %v613
      %630 = vst [vmem:[#allocation13 + $0x48] sm:$0xff] %v614
      %631 = vst [vmem:[#allocation13 + $0x50] sm:$0xff] %v615
      %632 = vst [vmem:[#allocation13 + $0x58] sm:$0xff] %v616
      %633 = vst [vmem:[#allocation13 + $0x60] sm:$0xff] %v617
      %634 = vst [vmem:[#allocation13 + $0x68] sm:$0xff] %v618
      %635 = vst [vmem:[#allocation13 + $0x70] sm:$0xff] %v619
      %636 = vst [vmem:[#allocation13 + $0x78] sm:$0xff] %v620
    $region49: #{tpu_custom_call.1} parent=1 // pred_fallthru
      _
    // Predicated region
    $region50: #{tpu_custom_call.1} parent=1 // pred_check
      _
    $region51: #{tpu_custom_call.1} parent=1 // pred_check_branch
      %638 = sbr.rel (0) target = $region53
    $region52: #{tpu_custom_call.1} parent=1 // pred_region
      %s640 = ssub.s32 2048, 2048
      %641 = vsyncadd [#allocation7], %s640
      %s642 = sshll.u32 [#allocation13], 4
      %s643 = int_to_ptr.vmem [resolvable:$true] %s642
      %648 = dma.vmem_to_hbm [thread:$0]  %s643, 2048, %s6, [#allocation7], 128, 128, 8
    $region53: #{tpu_custom_call.1} parent=1 // pred_fallthru
      _
    // Predicated region
    $region54: #{tpu_custom_call.1} parent=1 // pred_check
      _
    $region55: #{tpu_custom_call.1} parent=1 // pred_check_branch
      %650 = sbr.rel (0) target = $region57
    $region56: #{tpu_custom_call.1} parent=1 // pred_region
      %651 = dma.done [#allocation7], 2048
    $region57: #{tpu_custom_call.1} parent=1 // pred_fallthru
      _
    %652 = vsyncpa [#allocation6], 1
    %653 = vsyncpa [#allocation9], 1
    %654 = vsyncpa [#allocation12], 1
    %655 = vsyncpa [#allocation7], 1

</llo_original>
